<compile_context>
chip_gen: v5e
topology: v5e:2x2
jax: 0.10.0
libtpu: 0.0.40
codegen_flags: <defaults>
</compile_context>

<pallas_src>
import functools
import math

import numpy as np
import jax
import jax.numpy as jnp
from jax.experimental import pallas as pl
from jax.experimental.pallas import tpu as pltpu

ALPHA = 0.2          # LeakyReLU negative slope (the module's `alpha`)
NEG = -1e30          # mask value for non-edges (applied AFTER LeakyReLU)


def _round_up(x, m):
    return (x + m - 1) // m * m


# ---------------------------------------------------------------------------
# Kernel 1: fused projection  full = x @ [W | 0 | W@a1 | W@a2 | 0]
# ---------------------------------------------------------------------------
def _proj_kernel(f_pad, l_col, x_ref, w_ref, h_ref, fc_ref):
    full = jnp.dot(x_ref[...], w_ref[...], preferred_element_type=jnp.float32)
    h = full[:, :f_pad]
    # Ones column: makes sum(p) a byproduct of the p @ h matmul in kernel 2.
    col = jax.lax.broadcasted_iota(jnp.int32, h.shape, 1)
    h = jnp.where(col == l_col, 1.0, h)
    h_ref[...] = h.astype(h_ref.dtype)          # bf16, lane-dense
    fc_ref[...] = full[:, f_pad:]               # f32: [f1 | f2 | zeros...]


# ---------------------------------------------------------------------------
# Kernel 2: block-sparse online-softmax attention + spmm + ELU
# ---------------------------------------------------------------------------
def _attn_kernel(l_col,
                 nj_ref,                # SMEM (gi,)        non-empty tiles per row block
                 jmap_ref,              # SMEM (gi*max_nj,) non-empty col-tile indices
                 f1_ref,                # (tm, 1)   f32   source-side scores
                 f2_ref,                # (1, tn)   f32   dest-side scores (row layout)
                 adj_ref,               # (tm, tn)  int8  adjacency tile
                 h_ref,                 # (tn, f_pad) bf16 (ones in column l_col)
                 out_ref,               # (tm, f_pad) f32  resident accumulator / output
                 m_sc):                 # VMEM (tm, 1) f32 running row max
    i = pl.program_id(0)
    t = pl.program_id(1)

    @pl.when(t == 0)
    def _init():
        m_sc[...] = jnp.full_like(m_sc, -jnp.inf)
        out_ref[...] = jnp.zeros_like(out_ref)

    # Padding slots (t >= nj[i]) do no compute; their index_maps repeat the
    # previous block index so the adj/h/f2 DMAs are elided as well.
    @pl.when(t < nj_ref[i])
    def _body():
        s = f1_ref[...] + f2_ref[...]                 # (tm, tn) broadcast add
        s = jnp.where(s > 0, s, ALPHA * s)            # LeakyReLU
        s = jnp.where(adj_ref[...] > 0, s, NEG)       # mask non-edges

        m_new = jnp.maximum(m_sc[...], jnp.max(s, axis=-1, keepdims=True))
        corr = jnp.exp(m_sc[...] - m_new)             # rescale old stats
        p = jnp.exp(s - m_new)                        # masked -> underflow to 0
        # One bf16 MXU call yields numerator columns AND (via the ones column
        # of h) the softmax denominator; f32 accumulation into resident out.
        pk = jnp.dot(p.astype(jnp.bfloat16), h_ref[...],
                     preferred_element_type=jnp.float32)
        out_ref[...] = corr * out_ref[...] + pk
        m_sc[...] = m_new

    @pl.when(t == pl.num_programs(1) - 1)
    def _finalize():
        acc = out_ref[...]
        l = acc[:, l_col:l_col + 1]                   # softmax denominator
        # Rows that never saw a real edge keep m == -inf or == NEG exactly
        # (mask is applied after LeakyReLU): emit 0, matching the sparse
        # spmm's all-zero row (ELU(0) = 0).
        has_edge = m_sc[...] > (0.5 * NEG)
        inv = pl.reciprocal(jnp.maximum(l, 1e-30), approx=False)
        hp = jnp.where(has_edge, acc * inv, 0.0)
        out_ref[...] = jnp.where(hp > 0, hp,
                                 jnp.exp(jnp.minimum(hp, 0.0)) - 1.0)   # ELU


# ---------------------------------------------------------------------------
# Wrapper
# ---------------------------------------------------------------------------
def sp_graph_attention_forward(x, W, a, edge, *, tm=256, tn=256):
    """x: (N,F_in) f32, W: (F_in,F_out) f32, a: (1,2*F_out) f32, edge: (2,E) int32."""
    N, f_in = x.shape
    f_out = W.shape[1]

    n_pad = _round_up(N, math.lcm(tm, tn))
    # Lane-dense feature dim with at least one spare column for the ones trick.
    f_pad = _round_up(f_out + 1, 128)
    l_col = f_pad - 1
    gi, gj = n_pad // tm, n_pad // tn

    # ---- host-side glue: int8 adjacency + block-sparse schedule ----
    # TODO(synk): for production-size graphs build block-CSR tile lists instead
    # of an O(N^2) dense scatter, and fix max_nj to a static bound under jit.
    edge_np = np.asarray(edge)
    src, dst = edge_np[0], edge_np[1]
    adj_np = np.zeros((n_pad, n_pad), np.int8)
    adj_np[src, dst] = 1

    counts = np.zeros((gi, gj), np.int64)
    np.add.at(counts, (src // tm, dst // tn), 1)
    nonempty = [np.nonzero(counts[i] > 0)[0].astype(np.int32) for i in range(gi)]
    max_nj = max(1, max(len(c) for c in nonempty))
    nj_np = np.array([len(c) for c in nonempty], np.int32)       # 1-D SMEM table
    jmap_np = np.zeros((gi, max_nj), np.int32)
    for i, c in enumerate(nonempty):
        if len(c):
            jmap_np[i, :len(c)] = c
            jmap_np[i, len(c):] = c[-1]       # repeat last -> padding DMAs elided
    jmap_np = jmap_np.reshape(-1)             # 1-D: avoids 2-D SMEM padding blowup

    # ---- fused projection weights  [W | 0 | W@a1 | W@a2 | 0] ----
    x = x.astype(jnp.float32)
    W = W.astype(jnp.float32)
    a1 = a[0, :f_out].astype(jnp.float32)
    a2 = a[0, f_out:].astype(jnp.float32)
    w_full = jnp.zeros((f_in, f_pad + 128), jnp.float32)
    w_full = w_full.at[:, :f_out].set(W)
    w_full = w_full.at[:, f_pad].set(W @ a1)
    w_full = w_full.at[:, f_pad + 1].set(W @ a2)
    x_p = jnp.pad(x, ((0, n_pad - N), (0, 0)))
    # TODO(synk): for large F_in cast x_p / w_full to bf16 here; kept f32 for
    # score accuracy at this tiny K (MXU default precision is bf16 anyway).

    # ---- kernel 1: h (bf16) and score columns computed once ----
    h, fc = pl.pallas_call(
        functools.partial(_proj_kernel, f_pad, l_col),
        out_shape=(
            jax.ShapeDtypeStruct((n_pad, f_pad), jnp.bfloat16),
            jax.ShapeDtypeStruct((n_pad, 128), jnp.float32),
        ),
        grid_spec=pltpu.PrefetchScalarGridSpec(
            num_scalar_prefetch=0,
            grid=(gi,),
            in_specs=[
                pl.BlockSpec((tm, f_in), lambda i: (i, 0)),
                pl.BlockSpec((f_in, f_pad + 128), lambda i: (0, 0)),
            ],
            out_specs=[
                pl.BlockSpec((tm, f_pad), lambda i: (i, 0)),
                pl.BlockSpec((tm, 128), lambda i: (i, 0)),
            ],
        ),
        compiler_params=pltpu.CompilerParams(
            dimension_semantics=("parallel",)),
    )(x_p, w_full)

    f1 = fc[:, 0:1]                        # (n_pad, 1)  score contribution of source
    f2_row = fc[:, 1].reshape(1, n_pad)    # (1, n_pad)  score contribution of dest

    # ---- kernel 2: block-sparse online-softmax attention / spmm / ELU ----
    out_p = pl.pallas_call(
        functools.partial(_attn_kernel, l_col),
        out_shape=jax.ShapeDtypeStruct((n_pad, f_pad), jnp.float32),
        grid_spec=pltpu.PrefetchScalarGridSpec(
            num_scalar_prefetch=2,              # nj, jmap (block-sparse schedule)
            grid=(gi, max_nj),                  # axis 1 shrunk to non-empty tiles
            in_specs=[
                pl.BlockSpec((tm, 1), lambda i, t, nj, jm: (i, 0)),
                pl.BlockSpec((1, tn), lambda i, t, nj, jm: (0, jm[i * max_nj + t])),
                pl.BlockSpec((tm, tn), lambda i, t, nj, jm: (i, jm[i * max_nj + t])),
                pl.BlockSpec((tn, f_pad), lambda i, t, nj, jm: (jm[i * max_nj + t], 0)),
            ],
            out_specs=pl.BlockSpec((tm, f_pad), lambda i, t, nj, jm: (i, 0)),
            scratch_shapes=[
                pltpu.VMEM((tm, 1), jnp.float32),     # running row max
            ],
        ),
        compiler_params=pltpu.CompilerParams(
            # TODO(synk): on v7x, if one TensorCore idles, switch axis 0 to
            # pltpu.CORE_PARALLEL (row blocks are fully independent).
            dimension_semantics=("parallel", "arbitrary"),
            vmem_limit_bytes=48 * 1024 * 1024,        # headroom vs v7x 64 MiB
        ),
    )(jnp.asarray(nj_np), jnp.asarray(jmap_np), f1, f2_row,
      jnp.asarray(adj_np), h)

    return out_p[:N, :f_out]


# ---------------------------------------------------------------------------
# Edge-list (sparse) reference replicating the PyTorch module semantics
# (eval mode: dropout inactive).
# ---------------------------------------------------------------------------
def _reference_numpy(x, W, a, edge):
    x = np.asarray(x, np.float32)
    W = np.asarray(W, np.float32)
    a = np.asarray(a, np.float32)
    edge = np.asarray(edge)
    N, f_out = x.shape[0], W.shape[1]
    h = x @ W
    src, dst = edge[0], edge[1]
    a1, a2 = a[0, :f_out], a[0, f_out:]
    e = h[src] @ a1 + h[dst] @ a2
    e = np.where(e > 0, e, ALPHA * e)                      # LeakyReLU
    att = np.zeros_like(e)
    for r in np.unique(src):                               # per-source-row softmax
        idx = np.where(src == r)[0]
        v = e[idx]
        v = np.exp(v - v.max())
        att[idx] = v / v.sum()
    h_prime = np.zeros((N, f_out), np.float32)
    for k in range(edge.shape[1]):                         # spmm
        h_prime[src[k]] += att[k] * h[dst[k]]
    return np.where(h_prime > 0, h_prime, np.exp(h_prime) - 1.0)  # ELU


if __name__ == "__main__":
    N, in_features, out_features = 300, 16, 32             # pads to 512 -> 2x2 tiles
    gain = 1.414

    key = jax.random.PRNGKey(0)
    kx, kw, ka = jax.random.split(key, 3)

    # Deterministic xavier_normal_-style init (matching nn.init std).
    std_W = gain * np.sqrt(2.0 / (in_features + out_features))
    std_a = gain * np.sqrt(2.0 / (2 * out_features + 1))
    W = jax.random.normal(kw, (in_features, out_features), jnp.float32) * std_W
    a = jax.random.normal(ka, (1, 2 * out_features), jnp.float32) * std_a
    x = jax.random.normal(kx, (N, in_features), jnp.float32)

    # Unique edge set: self-loops + forward ring + backward ring (~3N edges).
    idx = np.arange(N)
    src = np.concatenate([idx, idx, idx])
    dst = np.concatenate([idx, (idx + 1) % N, (idx - 1) % N])
    edge = jnp.asarray(np.stack([src, dst]).astype(np.int32))

    out = sp_graph_attention_forward(x, W, a, edge)
    out = jax.block_until_ready(out)

    ref = _reference_numpy(x, W, a, edge)
    # Tolerance accounts for bf16 h / bf16 p on the MXU; softmax statistics
    # and the final normalization are f32 (exact reciprocal).
    np.testing.assert_allclose(np.asarray(out), ref, rtol=3e-2, atol=3e-2)

    print("KERNEL_OK")
</pallas_src>

<mosaic_0001>
module attributes {stable_mosaic.version = 11 : i64} {
  func.func @_proj_kernel(%arg0: i32, %arg1: memref<256x16xf32, #tpu.memory_space<vmem>>, %arg2: memref<16x256xf32, #tpu.memory_space<vmem>>, %arg3: memref<256x128xbf16, #tpu.memory_space<vmem>>, %arg4: memref<256x128xf32, #tpu.memory_space<vmem>>) attributes {dimension_semantics = [#tpu.dimension_semantics<parallel>], iteration_bounds = array<i64: 2>, scalar_prefetch = 0 : i64, scratch_operands = 0 : i64, tpu.core_type = #tpu.core_type<tc>, window_params = [{transform_indices = @transform_0, window_bounds = array<i64: 256, 16>}, {pipeline_mode = #tpu.pipeline_mode<synchronous>, transform_indices = @transform_1, window_bounds = array<i64: 16, 256>}, {transform_indices = @transform_2, window_bounds = array<i64: 256, 128>}, {transform_indices = @transform_3, window_bounds = array<i64: 256, 128>}]} {
    %c0 = arith.constant 0 : index
    %c0_0 = arith.constant 0 : index
    %0 = vector.load %arg1[%c0, %c0_0] : memref<256x16xf32, #tpu.memory_space<vmem>>, vector<256x16xf32>
    %c0_1 = arith.constant 0 : index
    %c0_2 = arith.constant 0 : index
    %1 = vector.load %arg2[%c0_1, %c0_2] : memref<16x256xf32, #tpu.memory_space<vmem>>, vector<16x256xf32>
    %cst = arith.constant dense<0.000000e+00> : vector<256x256xf32>
    %2 = tpu.matmul %0, %1, %cst {dimension_numbers = #tpu.dot_dimension_numbers<[1], [0], [0], [1], [0, 0, 1, 1], [], []>} : vector<256x16xf32>, vector<16x256xf32>, vector<256x256xf32> -> vector<256x256xf32>
    %3 = vector.extract_strided_slice %2 {offsets = [0, 0], sizes = [256, 128], strides = [1, 1]} : vector<256x256xf32> to vector<256x128xf32>
    %4 = tpu.iota {dimensions = array<i32: 1>} : vector<256x128xi32>
    %c127_i32 = arith.constant 127 : i32
    %5 = vector.broadcast %c127_i32 : i32 to vector<256x128xi32>
    %6 = arith.cmpi eq, %4, %5 : vector<256x128xi32>
    %cst_3 = arith.constant 1.000000e+00 : f32
    %7 = vector.broadcast %cst_3 : f32 to vector<256x128xf32>
    %8 = arith.select %6, %7, %3 : vector<256x128xi1>, vector<256x128xf32>
    %9 = arith.truncf %8 : vector<256x128xf32> to vector<256x128xbf16>
    %c0_4 = arith.constant 0 : index
    %c0_5 = arith.constant 0 : index
    %10 = vector.load %arg3[%c0_4, %c0_5] : memref<256x128xbf16, #tpu.memory_space<vmem>>, vector<256x128xbf16>
    tpu.vector_store %arg3[%c0_4, %c0_5], %9 {strides = array<i32>} : memref<256x128xbf16, #tpu.memory_space<vmem>>, vector<256x128xbf16>,
    %11 = vector.extract_strided_slice %2 {offsets = [0, 128], sizes = [256, 128], strides = [1, 1]} : vector<256x256xf32> to vector<256x128xf32>
    %c0_6 = arith.constant 0 : index
    %c0_7 = arith.constant 0 : index
    %12 = vector.load %arg4[%c0_6, %c0_7] : memref<256x128xf32, #tpu.memory_space<vmem>>, vector<256x128xf32>
    tpu.vector_store %arg4[%c0_6, %c0_7], %11 {strides = array<i32>} : memref<256x128xf32, #tpu.memory_space<vmem>>, vector<256x128xf32>,
    return
  }
  func.func @transform_0(%arg0: i32) -> (i32, i32) {
    %c0_i32 = arith.constant 0 : i32
    %c0_i32_0 = arith.constant 0 : i32
    return %arg0, %c0_i32 : i32, i32
  }
  func.func @transform_1(%arg0: i32) -> (i32, i32) {
    %c0_i32 = arith.constant 0 : i32
    %c0_i32_0 = arith.constant 0 : i32
    %c0_i32_1 = arith.constant 0 : i32
    return %c0_i32, %c0_i32_0 : i32, i32
  }
  func.func @transform_2(%arg0: i32) -> (i32, i32) {
    %c0_i32 = arith.constant 0 : i32
    %c0_i32_0 = arith.constant 0 : i32
    return %arg0, %c0_i32 : i32, i32
  }
  func.func @transform_3(%arg0: i32) -> (i32, i32) {
    %c0_i32 = arith.constant 0 : i32
    %c0_i32_0 = arith.constant 0 : i32
    return %arg0, %c0_i32 : i32, i32
  }
}

</mosaic_0001>

<llo_original>
// kernel: tpu_custom_call.1
$region0: #{tpu_custom_call.1}
  #allocation0 [shape = 'u32[]', space=smem, size = 0x4, offset = 0x4, fixed_abs, tag = 'smem constant byte address 0x4 - core index']
  #allocation1 [shape = 'u32[72,128]{1,0:T(1,128)}', space=vmem, size = 0x9000, scoped, tag = 'internal scratch']
  %s0 = inlined_call_operand.vmem [shape: f32[512,16], index: 0, kind: input, shape index: {}]
  %s1 = inlined_call_operand.vmem [shape: f32[16,256], index: 1, kind: input, shape index: {}]
  %s2 = inlined_call_operand.hbm [shape: bf16[512,128], index: 2, kind: output, shape index: {0}]
  %s3 = inlined_call_operand.hbm [shape: f32[512,128], index: 3, kind: output, shape index: {1}]
  %4 = xla_tuple %s2, %s3
  %s5 = sld [smem:[#allocation0]]
  $region49: #{tpu_custom_call.1} parent=0
    _
  %s7 = ssub.s32 1, %s5
  %s8 = scalar_select 0, %s7, %s5
  $region1: #{tpu_custom_call.1} parent=0
    #allocation2 [shape = 'u8[131072]{0}', space=vmem, size = 0x20000, scoped, tag = 'output window, operand 0']
    #allocation3 [shape = 's32[2]{0}', space=sflag, size = 0x8, scoped, tag = 'scoped memory for tpu_custom_call.1']
    #allocation4 [shape = 'u8[262144]{0}', space=vmem, size = 0x40000, scoped, tag = 'output window, operand 1']
    #allocation5 [shape = 's32[2]{0}', space=sflag, size = 0x8, scoped, tag = 'scoped memory for tpu_custom_call.1']
    %9 = vsyncpa [#allocation3], 0
    %s10 = scalar_lea.sflag [#allocation3], 1
    %11 = vsyncpa %s10, 0
    %12 = vsyncpa [#allocation5], 0
    %s13 = scalar_lea.sflag [#allocation5], 1
    %14 = vsyncpa %s13, 0
    loop: start=0, step=1, limit=4
    $region2: #{tpu_custom_call.1} parent=1 // loop_pre_header
      _
    $region3: #{tpu_custom_call.1} parent=1 // loop_header
      %s16 = sphi 0, %s20
      %p17 = scmp.ge.s32.totalorder %s16, 4
      %s26 = sphi 0, %s28
      %s29 = sphi 0, %s26
      %s30 = sphi 0, %s29
      %s46 = sphi 0, %s30
      %s50 = sphi 0, %s50
      %s52 = sphi 0, %s50
      %s53 = sphi 0, %s52
      %s67 = sphi 0, %s53
      %s73 = sphi 0, %s75
      %s76 = sphi 0, %s73
      %s77 = sphi 0, %s76
      %s93 = sphi 0, %s77
      %s99 = sphi 0, %s101
      %s102 = sphi 0, %s99
      %s103 = sphi 0, %s102
      %s119 = sphi 0, %s103
    $region4: #{tpu_custom_call.1} parent=1 // loop_header_branch
      %19 = sbr.rel (%p17) target = $region8
    $region5: #{tpu_custom_call.1} parent=1 // loop_body
      %s21 = ssub.s32 %s16, 1
      %s22 = ssub.s32 %s16, 2
      %s23 = sadd.s32 %s16, 1
      %s24 = ssub.s32 %s16, %s23
      %p25 = scmp.eq.s32.totalorder %s24, 0
      %s27 = sadd.s32 %s26, 1
      %s28 = scalar_select %p25, %s26, %s27
      %p31 = pneg %p25
      %p32 = scmp.eq.s32.totalorder %s16, 1
      %p33 = por %p31, %p32
      %p34 = scmp.ne.s32.totalorder %s26, %s29
      %p35 = scmp.eq.s32.totalorder %s16, 0
      %p36 = por %p34, %p35
      %p37 = scmp.ne.s32.totalorder %s26, %s29
      %p38 = scmp.eq.s32.totalorder %s21, 1
      %p39 = por %p37, %p38
      %p40 = scmp.ne.s32.totalorder %s29, %s30
      %p41 = scmp.eq.s32.totalorder %s21, 0
      %p42 = por %p40, %p41
      %p43 = scmp.ne.s32.totalorder %s29, %s30
      %p44 = scmp.eq.s32.totalorder %s22, 1
      %p45 = por %p43, %p44
      %p47 = scmp.ne.s32.totalorder %s30, %s46
      %p48 = scmp.eq.s32.totalorder %s22, 0
      %p49 = por %p47, %p48
      %s51 = sadd.s32 %s50, 1
      %p54 = scmp.eq.s32.totalorder %s16, 1
      %p55 = scmp.ne.s32.totalorder %s50, %s52
      %p56 = scmp.eq.s32.totalorder %s16, 0
      %p57 = por %p55, %p56
      %p58 = scmp.ne.s32.totalorder %s50, %s52
      %p59 = scmp.eq.s32.totalorder %s21, 1
      %p60 = por %p58, %p59
      %p61 = scmp.ne.s32.totalorder %s52, %s53
      %p62 = scmp.eq.s32.totalorder %s21, 0
      %p63 = por %p61, %p62
      %p64 = scmp.ne.s32.totalorder %s52, %s53
      %p65 = scmp.eq.s32.totalorder %s22, 1
      %p66 = por %p64, %p65
      %p68 = scmp.ne.s32.totalorder %s53, %s67
      %p69 = scmp.eq.s32.totalorder %s22, 0
      %p70 = por %p68, %p69
      %s71 = ssub.s32 %s16, %s23
      %p72 = scmp.eq.s32.totalorder %s71, 0
      %s74 = sadd.s32 %s73, 1
      %s75 = scalar_select %p72, %s73, %s74
      %p78 = pneg %p72
      %p79 = scmp.eq.s32.totalorder %s16, 1
      %p80 = por %p78, %p79
      %p81 = scmp.ne.s32.totalorder %s73, %s76
      %p82 = scmp.eq.s32.totalorder %s16, 0
      %p83 = por %p81, %p82
      %p84 = scmp.ne.s32.totalorder %s73, %s76
      %p85 = scmp.eq.s32.totalorder %s21, 1
      %p86 = por %p84, %p85
      %p87 = scmp.ne.s32.totalorder %s76, %s77
      %p88 = scmp.eq.s32.totalorder %s21, 0
      %p89 = por %p87, %p88
      %p90 = scmp.ne.s32.totalorder %s76, %s77
      %p91 = scmp.eq.s32.totalorder %s22, 1
      %p92 = por %p90, %p91
      %p94 = scmp.ne.s32.totalorder %s77, %s93
      %p95 = scmp.eq.s32.totalorder %s22, 0
      %p96 = por %p94, %p95
      %s97 = ssub.s32 %s16, %s23
      %p98 = scmp.eq.s32.totalorder %s97, 0
      %s100 = sadd.s32 %s99, 1
      %s101 = scalar_select %p98, %s99, %s100
      %p104 = pneg %p98
      %p105 = scmp.eq.s32.totalorder %s16, 1
      %p106 = por %p104, %p105
      %p107 = scmp.ne.s32.totalorder %s99, %s102
      %p108 = scmp.eq.s32.totalorder %s16, 0
      %p109 = por %p107, %p108
      %p110 = scmp.ne.s32.totalorder %s99, %s102
      %p111 = scmp.eq.s32.totalorder %s21, 1
      %p112 = por %p110, %p111
      %p113 = scmp.ne.s32.totalorder %s102, %s103
      %p114 = scmp.eq.s32.totalorder %s21, 0
      %p115 = por %p113, %p114
      %p116 = scmp.ne.s32.totalorder %s102, %s103
      %p117 = scmp.eq.s32.totalorder %s22, 1
      %p118 = por %p116, %p117
      %p120 = scmp.ne.s32.totalorder %s103, %s119
      %p121 = scmp.eq.s32.totalorder %s22, 0
      %p122 = por %p120, %p121
      %p123 = scmp.le.s32.totalorder 1, %s16
      %p124 = scmp.lt.s32.totalorder %s16, 3
      %p125 = pnand %p123, %p124
      %p126 = pneg %p125
      // Predicated region
      $region9: #{tpu_custom_call.1} parent=5 // pred_check
        _
      $region10: #{tpu_custom_call.1} parent=5 // pred_check_branch
        %128 = sbr.rel (%p125) target = $region12
      $region11: #{tpu_custom_call.1} parent=5 // pred_region
        %s129 = ssub.s32 %s16, 1
        // Predicated region
        $region13: #{tpu_custom_call.1} parent=11 // pred_check
          %p130 = pneg %p63
        $region14: #{tpu_custom_call.1} parent=11 // pred_check_branch
          %132 = sbr.rel (%p130) target = $region16
        $region15: #{tpu_custom_call.1} parent=11 // pred_region
          _
        $region16: #{tpu_custom_call.1} parent=11 // pred_fallthru
          _
      $region12: #{tpu_custom_call.1} parent=5 // pred_fallthru
        _
      %p133 = scmp.lt.s32.totalorder %s16, 2
      // Predicated region
      $region17: #{tpu_custom_call.1} parent=5 // pred_check
        %p134 = pneg %p133
      $region18: #{tpu_custom_call.1} parent=5 // pred_check_branch
        %136 = sbr.rel (%p134) target = $region20
      $region19: #{tpu_custom_call.1} parent=5 // pred_region
        // Predicated region
        $region21: #{tpu_custom_call.1} parent=19 // pred_check
          %p137 = pneg %p36
        $region22: #{tpu_custom_call.1} parent=19 // pred_check_branch
          %139 = sbr.rel (%p137) target = $region24
        $region23: #{tpu_custom_call.1} parent=19 // pred_region
          %s140 = smul.u32 32, %s16
          %p141 = scmp.lt.s32.totalorder %s140, 63
          %s142 = scalar_select %p141, %s140, 63
          %s143 = smul.addr %s142, 8
          %s144 = scalar_lea.vmem %s0, %s143
          %s145 = smul.u32 32, %s16
        $region24: #{tpu_custom_call.1} parent=19 // pred_fallthru
          _
      $region20: #{tpu_custom_call.1} parent=5 // pred_fallthru
        _
      %p146 = scmp.le.s32.totalorder 1, %s16
      %p147 = scmp.lt.s32.totalorder %s16, 3
      %p148 = pnand %p146, %p147
      %p149 = pneg %p148
      // Predicated region
      $region25: #{tpu_custom_call.1} parent=5 // pred_check
        _
      $region26: #{tpu_custom_call.1} parent=5 // pred_check_branch
        %151 = sbr.rel (%p148) target = $region28
      $region27: #{tpu_custom_call.1} parent=5 // pred_region
        %s152 = ssub.s32 %s16, 1
        %s153 = smul.u32 32, %s21
        %p154 = scmp.lt.s32.totalorder %s153, 63
        %s155 = scalar_select %p154, %s153, 63
        %s156 = smul.addr %s155, 8
        %s157 = scalar_lea.vmem %s0, %s156
        %p158 = pneg %p42
        %p159 = pneg %p39
        %p160 = pneg %p63
        %p161 = pneg %p60
        %p162 = pneg %p89
        %p163 = pneg %p86
        %s164 = sand.u32 %s76, 1
        %s165 = scalar_lea.sflag [#allocation3], %s164
        %s166 = sand.u32 %s76, 1
        %s167 = smul.addr %s166, 128
        %s168 = scalar_lea.vmem [#allocation2], %s167
        %p169 = pneg %p115
        %p170 = pneg %p112
        %s171 = sand.u32 %s102, 1
        %s172 = scalar_lea.sflag [#allocation5], %s171
        %s173 = sand.u32 %s102, 1
        %s174 = smul.addr %s173, 256
        %s175 = scalar_lea.vmem [#allocation4], %s174
        %s176 = smul.u32 32, %s21
        %p177 = scmp.lt.s32.totalorder %s176, 63
        %s178 = scalar_select %p177, %s176, 63
        %s179 = smul.addr %s178, 8
        %s180 = scalar_lea.vmem %s0, %s179
        %s181 = smul.u32 32, %s21
        %s182 = smul.u32 32, %s21
        %s183 = smul.u32 32, %s21
        %v184 = vld [vmem:[%s180] sm:$0xff]
        %v185 = vld [vmem:[%s180 + $0x8] sm:$0xff]
        %v186 = vld [vmem:[%s180 + $0x10] sm:$0xff]
        %v187 = vld [vmem:[%s180 + $0x18] sm:$0xff]
        %v188 = vld [vmem:[%s180 + $0x20] sm:$0xff]
        %v189 = vld [vmem:[%s180 + $0x28] sm:$0xff]
        %v190 = vld [vmem:[%s180 + $0x30] sm:$0xff]
        %v191 = vld [vmem:[%s180 + $0x38] sm:$0xff]
        %v192 = vld [vmem:[%s180 + $0x40] sm:$0xff]
        %v193 = vld [vmem:[%s180 + $0x48] sm:$0xff]
        %v194 = vld [vmem:[%s180 + $0x50] sm:$0xff]
        %v195 = vld [vmem:[%s180 + $0x58] sm:$0xff]
        %v196 = vld [vmem:[%s180 + $0x60] sm:$0xff]
        %v197 = vld [vmem:[%s180 + $0x68] sm:$0xff]
        %v198 = vld [vmem:[%s180 + $0x70] sm:$0xff]
        %v199 = vld [vmem:[%s180 + $0x78] sm:$0xff]
        %v200 = vld [vmem:[%s180 + $0x80] sm:$0xff]
        %v201 = vld [vmem:[%s180 + $0x88] sm:$0xff]
        %v202 = vld [vmem:[%s180 + $0x90] sm:$0xff]
        %v203 = vld [vmem:[%s180 + $0x98] sm:$0xff]
        %v204 = vld [vmem:[%s180 + $0xa0] sm:$0xff]
        %v205 = vld [vmem:[%s180 + $0xa8] sm:$0xff]
        %v206 = vld [vmem:[%s180 + $0xb0] sm:$0xff]
        %v207 = vld [vmem:[%s180 + $0xb8] sm:$0xff]
        %v208 = vld [vmem:[%s180 + $0xc0] sm:$0xff]
        %v209 = vld [vmem:[%s180 + $0xc8] sm:$0xff]
        %v210 = vld [vmem:[%s180 + $0xd0] sm:$0xff]
        %v211 = vld [vmem:[%s180 + $0xd8] sm:$0xff]
        %v212 = vld [vmem:[%s180 + $0xe0] sm:$0xff]
        %v213 = vld [vmem:[%s180 + $0xe8] sm:$0xff]
        %v214 = vld [vmem:[%s180 + $0xf0] sm:$0xff]
        %v215 = vld [vmem:[%s180 + $0xf8] sm:$0xff]
        %v216 = vld [vmem:[%s1] sm:$0xff]
        %v217 = vld [vmem:[%s1 + $0x8] sm:$0xff]
        %v218 = vld [vmem:[%s1 + $0x10] sm:$0xff]
        %v219 = vld [vmem:[%s1 + $0x18] sm:$0xff]
        %vm220 = vcmask 130048
        %v222 = vsel %vm220, %v184, 0
        %v225 = vsel %vm220, %v185, 0
        %v228 = vsel %vm220, %v186, 0
        %v231 = vsel %vm220, %v187, 0
        %v234 = vsel %vm220, %v188, 0
        %v237 = vsel %vm220, %v189, 0
        %v240 = vsel %vm220, %v190, 0
        %v243 = vsel %vm220, %v191, 0
        %v246 = vsel %vm220, %v192, 0
        %v249 = vsel %vm220, %v193, 0
        %v252 = vsel %vm220, %v194, 0
        %v255 = vsel %vm220, %v195, 0
        %v258 = vsel %vm220, %v196, 0
        %v261 = vsel %vm220, %v197, 0
        %v264 = vsel %vm220, %v198, 0
        %v267 = vsel %vm220, %v199, 0
        %v270 = vsel %vm220, %v200, 0
        %v273 = vsel %vm220, %v201, 0
        %v276 = vsel %vm220, %v202, 0
        %v279 = vsel %vm220, %v203, 0
        %v282 = vsel %vm220, %v204, 0
        %v285 = vsel %vm220, %v205, 0
        %v288 = vsel %vm220, %v206, 0
        %v291 = vsel %vm220, %v207, 0
        %v294 = vsel %vm220, %v208, 0
        %v297 = vsel %vm220, %v209, 0
        %v300 = vsel %vm220, %v210, 0
        %v303 = vsel %vm220, %v211, 0
        %v306 = vsel %vm220, %v212, 0
        %v309 = vsel %vm220, %v213, 0
        %v312 = vsel %vm220, %v214, 0
        %v315 = vsel %vm220, %v215, 0
        %317 = vmatpush.msra.mxu0 0.0
        %318 = vmatpush.msra.mxu0 0.0
        %319 = vmatpush.msra.mxu0 0.0
        %320 = vmatpush.msra.mxu0 0.0
        %321 = vmatpush.msra.mxu0 0.0
        %322 = vmatpush.msra.mxu0 0.0
        %323 = vmatpush.msra.mxu0 0.0
        %324 = vmatpush.msra.mxu0 0.0
        %325 = vmatpush.msra.mxu0 0.0
        %326 = vmatpush.msra.mxu0 0.0
        %327 = vmatpush.msra.mxu0 0.0
        %328 = vmatpush.msra.mxu0 0.0
        %329 = vmatpush.msra.mxu0 0.0
        %330 = vmatpush.msra.mxu0 0.0
        %331 = vmatpush.msra.mxu0 %v218
        %332 = vmatpush.msra.mxu0 %v216
        %333 = vmatmul.f32.gmra.mxu0 %v222
        %v334 = vpop.f32.mrf.mxu0
        %v335 = vadd.f32 0.0, %v334
        %336 = vmatmul.f32.gmra.mxu0 %v225
        %v337 = vpop.f32.mrf.mxu0
        %v338 = vadd.f32 0.0, %v337
        %339 = vmatmul.f32.gmra.mxu0 %v228
        %v340 = vpop.f32.mrf.mxu0
        %v341 = vadd.f32 0.0, %v340
        %342 = vmatmul.f32.gmra.mxu0 %v231
        %v343 = vpop.f32.mrf.mxu0
        %v344 = vadd.f32 0.0, %v343
        %345 = vmatmul.f32.gmra.mxu0 %v234
        %v346 = vpop.f32.mrf.mxu0
        %v347 = vadd.f32 0.0, %v346
        %348 = vmatmul.f32.gmra.mxu0 %v237
        %v349 = vpop.f32.mrf.mxu0
        %v350 = vadd.f32 0.0, %v349
        %351 = vmatmul.f32.gmra.mxu0 %v240
        %v352 = vpop.f32.mrf.mxu0
        %v353 = vadd.f32 0.0, %v352
        %354 = vmatmul.f32.gmra.mxu0 %v243
        %v355 = vpop.f32.mrf.mxu0
        %v356 = vadd.f32 0.0, %v355
        %357 = vmatmul.f32.gmra.mxu0 %v246
        %v358 = vpop.f32.mrf.mxu0
        %v359 = vadd.f32 0.0, %v358
        %360 = vmatmul.f32.gmra.mxu0 %v249
        %v361 = vpop.f32.mrf.mxu0
        %v362 = vadd.f32 0.0, %v361
        %363 = vmatmul.f32.gmra.mxu0 %v252
        %v364 = vpop.f32.mrf.mxu0
        %v365 = vadd.f32 0.0, %v364
        %366 = vmatmul.f32.gmra.mxu0 %v255
        %v367 = vpop.f32.mrf.mxu0
        %v368 = vadd.f32 0.0, %v367
        %369 = vmatmul.f32.gmra.mxu0 %v258
        %v370 = vpop.f32.mrf.mxu0
        %v371 = vadd.f32 0.0, %v370
        %372 = vmatmul.f32.gmra.mxu0 %v261
        %v373 = vpop.f32.mrf.mxu0
        %v374 = vadd.f32 0.0, %v373
        %375 = vmatmul.f32.gmra.mxu0 %v264
        %v376 = vpop.f32.mrf.mxu0
        %v377 = vadd.f32 0.0, %v376
        %378 = vmatmul.f32.gmra.mxu0 %v267
        %v379 = vpop.f32.mrf.mxu0
        %v380 = vadd.f32 0.0, %v379
        %381 = vmatmul.f32.gmra.mxu0 %v270
        %v382 = vpop.f32.mrf.mxu0
        %v383 = vadd.f32 0.0, %v382
        %384 = vmatmul.f32.gmra.mxu0 %v273
        %v385 = vpop.f32.mrf.mxu0
        %v386 = vadd.f32 0.0, %v385
        %387 = vmatmul.f32.gmra.mxu0 %v276
        %v388 = vpop.f32.mrf.mxu0
        %v389 = vadd.f32 0.0, %v388
        %390 = vmatmul.f32.gmra.mxu0 %v279
        %v391 = vpop.f32.mrf.mxu0
        %v392 = vadd.f32 0.0, %v391
        %393 = vmatmul.f32.gmra.mxu0 %v282
        %v394 = vpop.f32.mrf.mxu0
        %v395 = vadd.f32 0.0, %v394
        %396 = vmatmul.f32.gmra.mxu0 %v285
        %v397 = vpop.f32.mrf.mxu0
        %v398 = vadd.f32 0.0, %v397
        %399 = vmatmul.f32.gmra.mxu0 %v288
        %v400 = vpop.f32.mrf.mxu0
        %v401 = vadd.f32 0.0, %v400
        %402 = vmatmul.f32.gmra.mxu0 %v291
        %v403 = vpop.f32.mrf.mxu0
        %v404 = vadd.f32 0.0, %v403
        %405 = vmatmul.f32.gmra.mxu0 %v294
        %v406 = vpop.f32.mrf.mxu0
        %v407 = vadd.f32 0.0, %v406
        %408 = vmatmul.f32.gmra.mxu0 %v297
        %v409 = vpop.f32.mrf.mxu0
        %v410 = vadd.f32 0.0, %v409
        %411 = vmatmul.f32.gmra.mxu0 %v300
        %v412 = vpop.f32.mrf.mxu0
        %v413 = vadd.f32 0.0, %v412
        %414 = vmatmul.f32.gmra.mxu0 %v303
        %v415 = vpop.f32.mrf.mxu0
        %v416 = vadd.f32 0.0, %v415
        %417 = vmatmul.f32.gmra.mxu0 %v306
        %v418 = vpop.f32.mrf.mxu0
        %v419 = vadd.f32 0.0, %v418
        %420 = vmatmul.f32.gmra.mxu0 %v309
        %v421 = vpop.f32.mrf.mxu0
        %v422 = vadd.f32 0.0, %v421
        %423 = vmatmul.f32.gmra.mxu0 %v312
        %v424 = vpop.f32.mrf.mxu0
        %v425 = vadd.f32 0.0, %v424
        %426 = vmatmul.f32.gmra.mxu0 %v315
        %v427 = vpop.f32.mrf.mxu0
        %v428 = vadd.f32 0.0, %v427
        %429 = vdwg.mxu0
        %430 = vmatpush.msra.mxu0 0.0
        %431 = vmatpush.msra.mxu0 0.0
        %432 = vmatpush.msra.mxu0 0.0
        %433 = vmatpush.msra.mxu0 0.0
        %434 = vmatpush.msra.mxu0 0.0
        %435 = vmatpush.msra.mxu0 0.0
        %436 = vmatpush.msra.mxu0 0.0
        %437 = vmatpush.msra.mxu0 0.0
        %438 = vmatpush.msra.mxu0 0.0
        %439 = vmatpush.msra.mxu0 0.0
        %440 = vmatpush.msra.mxu0 0.0
        %441 = vmatpush.msra.mxu0 0.0
        %442 = vmatpush.msra.mxu0 0.0
        %443 = vmatpush.msra.mxu0 0.0
        %444 = vmatpush.msra.mxu0 %v219
        %445 = vmatpush.msra.mxu0 %v217
        %446 = vmatmul.f32.gmra.mxu0 %v222
        %v447 = vpop.f32.mrf.mxu0
        %v448 = vadd.f32 0.0, %v447
        %449 = vmatmul.f32.gmra.mxu0 %v225
        %v450 = vpop.f32.mrf.mxu0
        %v451 = vadd.f32 0.0, %v450
        %452 = vmatmul.f32.gmra.mxu0 %v228
        %v453 = vpop.f32.mrf.mxu0
        %v454 = vadd.f32 0.0, %v453
        %455 = vmatmul.f32.gmra.mxu0 %v231
        %v456 = vpop.f32.mrf.mxu0
        %v457 = vadd.f32 0.0, %v456
        %458 = vmatmul.f32.gmra.mxu0 %v234
        %v459 = vpop.f32.mrf.mxu0
        %v460 = vadd.f32 0.0, %v459
        %461 = vmatmul.f32.gmra.mxu0 %v237
        %v462 = vpop.f32.mrf.mxu0
        %v463 = vadd.f32 0.0, %v462
        %464 = vmatmul.f32.gmra.mxu0 %v240
        %v465 = vpop.f32.mrf.mxu0
        %v466 = vadd.f32 0.0, %v465
        %467 = vmatmul.f32.gmra.mxu0 %v243
        %v468 = vpop.f32.mrf.mxu0
        %v469 = vadd.f32 0.0, %v468
        %470 = vmatmul.f32.gmra.mxu0 %v246
        %v471 = vpop.f32.mrf.mxu0
        %v472 = vadd.f32 0.0, %v471
        %473 = vmatmul.f32.gmra.mxu0 %v249
        %v474 = vpop.f32.mrf.mxu0
        %v475 = vadd.f32 0.0, %v474
        %476 = vmatmul.f32.gmra.mxu0 %v252
        %v477 = vpop.f32.mrf.mxu0
        %v478 = vadd.f32 0.0, %v477
        %479 = vmatmul.f32.gmra.mxu0 %v255
        %v480 = vpop.f32.mrf.mxu0
        %v481 = vadd.f32 0.0, %v480
        %482 = vmatmul.f32.gmra.mxu0 %v258
        %v483 = vpop.f32.mrf.mxu0
        %v484 = vadd.f32 0.0, %v483
        %485 = vmatmul.f32.gmra.mxu0 %v261
        %v486 = vpop.f32.mrf.mxu0
        %v487 = vadd.f32 0.0, %v486
        %488 = vmatmul.f32.gmra.mxu0 %v264
        %v489 = vpop.f32.mrf.mxu0
        %v490 = vadd.f32 0.0, %v489
        %491 = vmatmul.f32.gmra.mxu0 %v267
        %v492 = vpop.f32.mrf.mxu0
        %v493 = vadd.f32 0.0, %v492
        %494 = vmatmul.f32.gmra.mxu0 %v270
        %v495 = vpop.f32.mrf.mxu0
        %v496 = vadd.f32 0.0, %v495
        %497 = vmatmul.f32.gmra.mxu0 %v273
        %v498 = vpop.f32.mrf.mxu0
        %v499 = vadd.f32 0.0, %v498
        %500 = vmatmul.f32.gmra.mxu0 %v276
        %v501 = vpop.f32.mrf.mxu0
        %v502 = vadd.f32 0.0, %v501
        %503 = vmatmul.f32.gmra.mxu0 %v279
        %v504 = vpop.f32.mrf.mxu0
        %v505 = vadd.f32 0.0, %v504
        %506 = vmatmul.f32.gmra.mxu0 %v282
        %v507 = vpop.f32.mrf.mxu0
        %v508 = vadd.f32 0.0, %v507
        %509 = vmatmul.f32.gmra.mxu0 %v285
        %v510 = vpop.f32.mrf.mxu0
        %v511 = vadd.f32 0.0, %v510
        %512 = vmatmul.f32.gmra.mxu0 %v288
        %v513 = vpop.f32.mrf.mxu0
        %v514 = vadd.f32 0.0, %v513
        %515 = vmatmul.f32.gmra.mxu0 %v291
        %v516 = vpop.f32.mrf.mxu0
        %v517 = vadd.f32 0.0, %v516
        %518 = vmatmul.f32.gmra.mxu0 %v294
        %v519 = vpop.f32.mrf.mxu0
        %v520 = vadd.f32 0.0, %v519
        %521 = vmatmul.f32.gmra.mxu0 %v297
        %v522 = vpop.f32.mrf.mxu0
        %v523 = vadd.f32 0.0, %v522
        %524 = vmatmul.f32.gmra.mxu0 %v300
        %v525 = vpop.f32.mrf.mxu0
        %v526 = vadd.f32 0.0, %v525
        %527 = vmatmul.f32.gmra.mxu0 %v303
        %v528 = vpop.f32.mrf.mxu0
        %v529 = vadd.f32 0.0, %v528
        %530 = vmatmul.f32.gmra.mxu0 %v306
        %v531 = vpop.f32.mrf.mxu0
        %v532 = vadd.f32 0.0, %v531
        %533 = vmatmul.f32.gmra.mxu0 %v309
        %v534 = vpop.f32.mrf.mxu0
        %v535 = vadd.f32 0.0, %v534
        %536 = vmatmul.f32.gmra.mxu0 %v312
        %v537 = vpop.f32.mrf.mxu0
        %v538 = vadd.f32 0.0, %v537
        %539 = vmatmul.f32.gmra.mxu0 %v315
        %v540 = vpop.f32.mrf.mxu0
        %v541 = vadd.f32 0.0, %v540
        %542 = vdwg.mxu0
        %v543 = vlaneseq
        %v544 = vand.u32 %v543, 127
        %vm545 = vcmp.eq.s32.totalorder %v544, 127
        %v546 = vsel %vm545, 1.0, %v335
        %v547 = vsel %vm545, 1.0, %v338
        %v548 = vsel %vm545, 1.0, %v341
        %v549 = vsel %vm545, 1.0, %v344
        %v550 = vsel %vm545, 1.0, %v347
        %v551 = vsel %vm545, 1.0, %v350
        %v552 = vsel %vm545, 1.0, %v353
        %v553 = vsel %vm545, 1.0, %v356
        %v554 = vsel %vm545, 1.0, %v359
        %v555 = vsel %vm545, 1.0, %v362
        %v556 = vsel %vm545, 1.0, %v365
        %v557 = vsel %vm545, 1.0, %v368
        %v558 = vsel %vm545, 1.0, %v371
        %v559 = vsel %vm545, 1.0, %v374
        %v560 = vsel %vm545, 1.0, %v377
        %v561 = vsel %vm545, 1.0, %v380
        %v562 = vsel %vm545, 1.0, %v383
        %v563 = vsel %vm545, 1.0, %v386
        %v564 = vsel %vm545, 1.0, %v389
        %v565 = vsel %vm545, 1.0, %v392
        %v566 = vsel %vm545, 1.0, %v395
        %v567 = vsel %vm545, 1.0, %v398
        %v568 = vsel %vm545, 1.0, %v401
        %v569 = vsel %vm545, 1.0, %v404
        %v570 = vsel %vm545, 1.0, %v407
        %v571 = vsel %vm545, 1.0, %v410
        %v572 = vsel %vm545, 1.0, %v413
        %v573 = vsel %vm545, 1.0, %v416
        %v574 = vsel %vm545, 1.0, %v419
        %v575 = vsel %vm545, 1.0, %v422
        %v576 = vsel %vm545, 1.0, %v425
        %v577 = vsel %vm545, 1.0, %v428
        %v578 = vpack.c.bf16 %v546, %v546
        %v579 = vpack.c.bf16 %v547, %v547
        %v580 = vpack.c.bf16 %v548, %v548
        %v581 = vpack.c.bf16 %v549, %v549
        %v582 = vpack.c.bf16 %v550, %v550
        %v583 = vpack.c.bf16 %v551, %v551
        %v584 = vpack.c.bf16 %v552, %v552
        %v585 = vpack.c.bf16 %v553, %v553
        %v586 = vpack.c.bf16 %v554, %v554
        %v587 = vpack.c.bf16 %v555, %v555
        %v588 = vpack.c.bf16 %v556, %v556
        %v589 = vpack.c.bf16 %v557, %v557
        %v590 = vpack.c.bf16 %v558, %v558
        %v591 = vpack.c.bf16 %v559, %v559
        %v592 = vpack.c.bf16 %v560, %v560
        %v593 = vpack.c.bf16 %v561, %v561
        %v594 = vpack.c.bf16 %v562, %v562
        %v595 = vpack.c.bf16 %v563, %v563
        %v596 = vpack.c.bf16 %v564, %v564
        %v597 = vpack.c.bf16 %v565, %v565
        %v598 = vpack.c.bf16 %v566, %v566
        %v599 = vpack.c.bf16 %v567, %v567
        %v600 = vpack.c.bf16 %v568, %v568
        %v601 = vpack.c.bf16 %v569, %v569
        %v602 = vpack.c.bf16 %v570, %v570
        %v603 = vpack.c.bf16 %v571, %v571
        %v604 = vpack.c.bf16 %v572, %v572
        %v605 = vpack.c.bf16 %v573, %v573
        %v606 = vpack.c.bf16 %v574, %v574
        %v607 = vpack.c.bf16 %v575, %v575
        %v608 = vpack.c.bf16 %v576, %v576
        %v609 = vpack.c.bf16 %v577, %v577
        %610 = vst [vmem:[%s168] sm:$0xf] %v578
        %611 = vst [vmem:[%s168 + $0x4] sm:$0xf] %v579
        %612 = vst [vmem:[%s168 + $0x8] sm:$0xf] %v580
        %613 = vst [vmem:[%s168 + $0xc] sm:$0xf] %v581
        %614 = vst [vmem:[%s168 + $0x10] sm:$0xf] %v582
        %615 = vst [vmem:[%s168 + $0x14] sm:$0xf] %v583
        %616 = vst [vmem:[%s168 + $0x18] sm:$0xf] %v584
        %617 = vst [vmem:[%s168 + $0x1c] sm:$0xf] %v585
        %618 = vst [vmem:[%s168 + $0x20] sm:$0xf] %v586
        %619 = vst [vmem:[%s168 + $0x24] sm:$0xf] %v587
        %620 = vst [vmem:[%s168 + $0x28] sm:$0xf] %v588
        %621 = vst [vmem:[%s168 + $0x2c] sm:$0xf] %v589
        %622 = vst [vmem:[%s168 + $0x30] sm:$0xf] %v590
        %623 = vst [vmem:[%s168 + $0x34] sm:$0xf] %v591
        %624 = vst [vmem:[%s168 + $0x38] sm:$0xf] %v592
        %625 = vst [vmem:[%s168 + $0x3c] sm:$0xf] %v593
        %626 = vst [vmem:[%s168 + $0x40] sm:$0xf] %v594
        %627 = vst [vmem:[%s168 + $0x44] sm:$0xf] %v595
        %628 = vst [vmem:[%s168 + $0x48] sm:$0xf] %v596
        %629 = vst [vmem:[%s168 + $0x4c] sm:$0xf] %v597
        %630 = vst [vmem:[%s168 + $0x50] sm:$0xf] %v598
        %631 = vst [vmem:[%s168 + $0x54] sm:$0xf] %v599
        %632 = vst [vmem:[%s168 + $0x58] sm:$0xf] %v600
        %633 = vst [vmem:[%s168 + $0x5c] sm:$0xf] %v601
        %634 = vst [vmem:[%s168 + $0x60] sm:$0xf] %v602
        %635 = vst [vmem:[%s168 + $0x64] sm:$0xf] %v603
        %636 = vst [vmem:[%s168 + $0x68] sm:$0xf] %v604
        %637 = vst [vmem:[%s168 + $0x6c] sm:$0xf] %v605
        %638 = vst [vmem:[%s168 + $0x70] sm:$0xf] %v606
        %639 = vst [vmem:[%s168 + $0x74] sm:$0xf] %v607
        %640 = vst [vmem:[%s168 + $0x78] sm:$0xf] %v608
        %641 = vst [vmem:[%s168 + $0x7c] sm:$0xf] %v609
        %642 = vst [vmem:[%s175] sm:$0xff] %v448
        %643 = vst [vmem:[%s175 + $0x8] sm:$0xff] %v451
        %644 = vst [vmem:[%s175 + $0x10] sm:$0xff] %v454
        %645 = vst [vmem:[%s175 + $0x18] sm:$0xff] %v457
        %646 = vst [vmem:[%s175 + $0x20] sm:$0xff] %v460
        %647 = vst [vmem:[%s175 + $0x28] sm:$0xff] %v463
        %648 = vst [vmem:[%s175 + $0x30] sm:$0xff] %v466
        %649 = vst [vmem:[%s175 + $0x38] sm:$0xff] %v469
        %650 = vst [vmem:[%s175 + $0x40] sm:$0xff] %v472
        %651 = vst [vmem:[%s175 + $0x48] sm:$0xff] %v475
        %652 = vst [vmem:[%s175 + $0x50] sm:$0xff] %v478
        %653 = vst [vmem:[%s175 + $0x58] sm:$0xff] %v481
        %654 = vst [vmem:[%s175 + $0x60] sm:$0xff] %v484
        %655 = vst [vmem:[%s175 + $0x68] sm:$0xff] %v487
        %656 = vst [vmem:[%s175 + $0x70] sm:$0xff] %v490
        %657 = vst [vmem:[%s175 + $0x78] sm:$0xff] %v493
        %658 = vst [vmem:[%s175 + $0x80] sm:$0xff] %v496
        %659 = vst [vmem:[%s175 + $0x88] sm:$0xff] %v499
        %660 = vst [vmem:[%s175 + $0x90] sm:$0xff] %v502
        %661 = vst [vmem:[%s175 + $0x98] sm:$0xff] %v505
        %662 = vst [vmem:[%s175 + $0xa0] sm:$0xff] %v508
        %663 = vst [vmem:[%s175 + $0xa8] sm:$0xff] %v511
        %664 = vst [vmem:[%s175 + $0xb0] sm:$0xff] %v514
        %665 = vst [vmem:[%s175 + $0xb8] sm:$0xff] %v517
        %666 = vst [vmem:[%s175 + $0xc0] sm:$0xff] %v520
        %667 = vst [vmem:[%s175 + $0xc8] sm:$0xff] %v523
        %668 = vst [vmem:[%s175 + $0xd0] sm:$0xff] %v526
        %669 = vst [vmem:[%s175 + $0xd8] sm:$0xff] %v529
        %670 = vst [vmem:[%s175 + $0xe0] sm:$0xff] %v532
        %671 = vst [vmem:[%s175 + $0xe8] sm:$0xff] %v535
        %672 = vst [vmem:[%s175 + $0xf0] sm:$0xff] %v538
        %673 = vst [vmem:[%s175 + $0xf8] sm:$0xff] %v541
        %s674 = sand.u32 %s76, 1
        %s675 = scalar_lea.sflag [#allocation3], %s674
        %s676 = sand.u32 %s76, 1
        %s677 = smul.addr %s676, 128
        %s678 = scalar_lea.vmem [#allocation2], %s677
        %s679 = sand.u32 %s102, 1
        %s680 = scalar_lea.sflag [#allocation5], %s679
        %s681 = sand.u32 %s102, 1
        %s682 = smul.addr %s681, 256
        %s683 = scalar_lea.vmem [#allocation4], %s682
        // Predicated region
        $region29: #{tpu_custom_call.1} parent=27 // pred_check
          %p684 = pneg %p86
        $region30: #{tpu_custom_call.1} parent=27 // pred_check_branch
          %686 = sbr.rel (%p684) target = $region32
        $region31: #{tpu_custom_call.1} parent=27 // pred_region
          %s687 = smul.u32 32, %s21
          %689 = vsyncadd %s675, 0
          %s690 = smul.addr %s687, 4
          %s691 = scalar_lea.hbm %s2, %s690
          %s692 = sshll.u32 %s678, 4
          %s693 = int_to_ptr.vmem [resolvable:$true] %s692
          %s694 = sshll.u32 %s691, 4
          %s695 = int_to_ptr.hbm [resolvable:$true] %s694
          %700 = dma.vmem_to_hbm [thread:$0]  %s693, 2048, %s695, %s675, 64, 64, 4
        $region32: #{tpu_custom_call.1} parent=27 // pred_fallthru
          _
        // Predicated region
        $region33: #{tpu_custom_call.1} parent=27 // pred_check
          %p701 = pneg %p112
        $region34: #{tpu_custom_call.1} parent=27 // pred_check_branch
          %703 = sbr.rel (%p701) target = $region36
        $region35: #{tpu_custom_call.1} parent=27 // pred_region
          %s704 = smul.u32 32, %s21
          %706 = vsyncadd %s680, 0
          %s707 = smul.addr %s704, 8
          %s708 = scalar_lea.hbm %s3, %s707
          %s709 = sshll.u32 %s683, 4
          %s710 = int_to_ptr.vmem [resolvable:$true] %s709
          %s711 = sshll.u32 %s708, 4
          %s712 = int_to_ptr.hbm [resolvable:$true] %s711
          %717 = dma.vmem_to_hbm [thread:$0]  %s710, 4096, %s712, %s680, 128, 128, 8
        $region36: #{tpu_custom_call.1} parent=27 // pred_fallthru
          _
      $region28: #{tpu_custom_call.1} parent=5 // pred_fallthru
        _
      %p718 = scmp.le.s32.totalorder 2, %s16
      // Predicated region
      $region37: #{tpu_custom_call.1} parent=5 // pred_check
        %p719 = pneg %p718
      $region38: #{tpu_custom_call.1} parent=5 // pred_check_branch
        %721 = sbr.rel (%p719) target = $region40
      $region39: #{tpu_custom_call.1} parent=5 // pred_region
        %s722 = ssub.s32 %s16, 2
        // Predicated region
        $region41: #{tpu_custom_call.1} parent=39 // pred_check
          %p723 = pneg %p92
        $region42: #{tpu_custom_call.1} parent=39 // pred_check_branch
          %725 = sbr.rel (%p723) target = $region44
        $region43: #{tpu_custom_call.1} parent=39 // pred_region
          %s726 = sand.u32 %s77, 1
          %s727 = scalar_lea.sflag [#allocation3], %s726
          %s728 = sand.u32 %s77, 1
          %s729 = smul.addr %s728, 128
          %s730 = scalar_lea.vmem [#allocation2], %s729
          %732 = dma.done %s727, 2048
        $region44: #{tpu_custom_call.1} parent=39 // pred_fallthru
          _
        // Predicated region
        $region45: #{tpu_custom_call.1} parent=39 // pred_check
          %p733 = pneg %p118
        $region46: #{tpu_custom_call.1} parent=39 // pred_check_branch
          %735 = sbr.rel (%p733) target = $region48
        $region47: #{tpu_custom_call.1} parent=39 // pred_region
          %s736 = sand.u32 %s103, 1
          %s737 = scalar_lea.sflag [#allocation5], %s736
          %s738 = sand.u32 %s103, 1
          %s739 = smul.addr %s738, 256
          %s740 = scalar_lea.vmem [#allocation4], %s739
          %742 = dma.done %s737, 4096
        $region48: #{tpu_custom_call.1} parent=39 // pred_fallthru
          _
      $region40: #{tpu_custom_call.1} parent=5 // pred_fallthru
        _
    $region6: #{tpu_custom_call.1} parent=1 // loop_footer
      %s20 = sadd.s32 1, %s16
    $region7: #{tpu_custom_call.1} parent=1 // loop_footer_branch
      %15 = sbr.rel target = $region3
    $region8: #{tpu_custom_call.1} parent=1 // loop_exit
      _
    %743 = vsyncpa [#allocation3], 1
    %s744 = scalar_lea.sflag [#allocation3], 1
    %745 = vsyncpa %s744, 1
    %746 = vsyncpa [#allocation5], 1
    %s747 = scalar_lea.sflag [#allocation5], 1
    %748 = vsyncpa %s747, 1

</llo_original>
